<compile_context>
chip_gen: v5e
topology: v5e:2x2
jax: 0.10.0
libtpu: 0.0.40
codegen_flags: <defaults>
</compile_context>

<pallas_src>
import jax
import jax.numpy as jnp
import numpy as np
from jax.experimental import pallas as pl
from jax.experimental.pallas import tpu as pltpu

# ----- model config (small, consistent with the module) -----
VOCAB = 50
EMBED_DIM = 32            # embed_dim
NUM_FILTERS = 32          # num_filters
FILTER_SIZES = (3, 4, 5)  # must be consecutive ints (mask/packing assume it)
BATCH = 2
SEQ_LEN = 16

K_MIN = min(FILTER_SIZES)
K_MAX = max(FILTER_SIZES)
NUM_BRANCH = len(FILTER_SIZES)
assert FILTER_SIZES == tuple(range(K_MIN, K_MAX + 1))

VOCAB_PAD = pl.cdiv(VOCAB, 128) * 128                        # one-hot contract dim
CONV_PAD = pl.cdiv(NUM_BRANCH * NUM_FILTERS, 128) * 128      # packed filter / lane dim


def textcnn_kernel(ids_ref, tab_ref, wc_ref, bc_ref, mask_ref, fcw_ref, fcb_ref,
                   out_ref):
    tb, l = ids_ref.shape
    nrow = tb * l                     # flattened batch*time rows
    vpad, e = tab_ref.shape
    cpad = wc_ref.shape[1]

    # 1) Embedding lookup as a one-hot MXU matmul (bf16 table resident in VMEM).
    # TODO(synk): for a large vocab, keep the gather outside or use a DMA gather
    #             instead of the one-hot matmul.
    onehot = (jax.lax.broadcasted_iota(jnp.int32, (tb, l, vpad), 2)
              == ids_ref[...][:, :, None]).astype(jnp.bfloat16).reshape(nrow, vpad)
    emb = jax.lax.dot_general(onehot, tab_ref[...],
                              (((1,), (0,)), ((), ())),
                              preferred_element_type=jnp.float32)        # (nrow, E)

    # 2) im2col via XLU rolls of the in-register value (no scratch staging, no zero
    #    tail).  roll(emb, nrow - j) maps row r -> emb[(r + j) % nrow]; wrapped / bled
    #    rows only reach masked time positions or zero-padded weight columns.
    taps = [emb] + [pltpu.roll(emb, shift=nrow - j, axis=0) for j in range(1, K_MAX)]
    x = jnp.concatenate(taps, axis=-1).astype(jnp.bfloat16)              # (nrow, K_MAX*E)

    # 3) Single conv GEMM for ALL branches (bf16 in, f32 accumulate) + bias + ReLU.
    conv = jax.lax.dot_general(x, wc_ref[...],
                               (((1,), (0,)), ((), ())),
                               preferred_element_type=jnp.float32)       # (nrow, CONV_PAD)
    conv = jnp.maximum(conv + bc_ref[...], 0.0).reshape(tb, l, cpad)

    # 4) Masked max over time (host-precomputed 0/1 mask; post-ReLU >= 0 so zeroing
    #    invalid / bled positions preserves the max).
    pooled = jnp.max(conv * mask_ref[...][None, :, :], axis=1)           # (tb, CONV_PAD)

    # 5) FC in f32 (lane reduction) + sigmoid; dropout is identity at inference.
    logits = jnp.sum(pooled * fcw_ref[...], axis=1, keepdims=True) + fcb_ref[...]
    out_ref[...] = jax.nn.sigmoid(logits)                                # (tb, 1)


def pack_params(params):
    """Pre-pack weights (once, outside the kernel) into lane-dense MXU-friendly slabs."""
    nf, e = NUM_FILTERS, EMBED_DIM
    tab = jnp.zeros((VOCAB_PAD, e), jnp.float32).at[:VOCAB].set(params["embedding"])
    wc = jnp.zeros((K_MAX * e, CONV_PAD), jnp.float32)
    bc = jnp.zeros((1, CONV_PAD), jnp.float32)
    for g, k in enumerate(FILTER_SIZES):
        wc = wc.at[:k * e, g * nf:(g + 1) * nf].set(params[f"w{k}"].reshape(k * e, nf))
        bc = bc.at[:, g * nf:(g + 1) * nf].set(params[f"b{k}"])
    fcw_row = jnp.zeros((1, CONV_PAD), jnp.float32).at[0, :NUM_BRANCH * nf].set(
        params["fcw"][:, 0])
    fcb = params["fcb"].reshape(1, 1).astype(jnp.float32)
    return (tab.astype(jnp.bfloat16), wc.astype(jnp.bfloat16), bc, fcw_row, fcb)


def make_valid_mask(seq_len):
    """(seq_len, CONV_PAD) 0/1 mask: 1 iff time t is a valid window start for the
    branch owning that packed filter column (padded columns are 0)."""
    cols = np.arange(CONV_PAD)
    real = cols < NUM_BRANCH * NUM_FILTERS
    ksz = K_MIN + np.minimum(cols // NUM_FILTERS, NUM_BRANCH - 1)
    t = np.arange(seq_len)[:, None]
    valid = (t <= (seq_len - ksz)[None, :]) & real[None, :]
    return jnp.asarray(valid, dtype=jnp.float32)


def textcnn_forward(token_ids, params, batch_tile=None):
    b, l = token_ids.shape
    assert l >= K_MAX, "sequence must be at least as long as the largest filter"
    assert l % 8 == 0, "seq len must be a multiple of 8 (sublane tiling of flat views)"
    # batch_tile: None -> one big tile (best on single-TC v5e/v6e, raise vmem limit as
    # needed).  On v7x pick a multiple of 8 that yields >= 2 grid steps so both
    # TensorCores get work, sized against the 64 MiB VMEM part.
    tb = b if batch_tile is None else batch_tile
    assert b % tb == 0, "batch must be divisible by the batch tile"

    tab, wc, bc, fcw_row, fcb = pack_params(params)
    mask = make_valid_mask(l)
    ids = token_ids.astype(jnp.int32)                 # (b, l) — no 128x lane padding

    def full(a):
        nd = a.ndim
        return pl.BlockSpec(a.shape, lambda i, nd=nd: (0,) * nd)   # resident in VMEM

    out = pl.pallas_call(
        textcnn_kernel,
        grid=(b // tb,),
        in_specs=[pl.BlockSpec((tb, l), lambda i: (i, 0)),          # token ids (tiled)
                  full(tab), full(wc), full(bc), full(mask), full(fcw_row), full(fcb)],
        out_specs=pl.BlockSpec((tb, 1), lambda i: (i, 0)),
        out_shape=jax.ShapeDtypeStruct((b, 1), jnp.float32),
        compiler_params=pltpu.CompilerParams(
            dimension_semantics=("parallel",),        # batch tiles shard across TCs
            vmem_limit_bytes=32 * 1024 * 1024),       # raise v5e's 16 MiB default
    )(ids, tab, wc, bc, mask, fcw_row, fcb)
    return out[:, 0]


def init_params(key):
    ks = jax.random.split(key, 10)
    nf, e = NUM_FILTERS, EMBED_DIM
    p = {
        "embedding": jax.random.normal(ks[0], (VOCAB, e), jnp.float32) * 0.1,
        "w3": jax.random.normal(ks[1], (3, e, nf), jnp.float32) * 0.1,
        "b3": jax.random.normal(ks[2], (1, nf), jnp.float32) * 0.1,
        "w4": jax.random.normal(ks[3], (4, e, nf), jnp.float32) * 0.1,
        "b4": jax.random.normal(ks[4], (1, nf), jnp.float32) * 0.1,
        "w5": jax.random.normal(ks[5], (5, e, nf), jnp.float32) * 0.1,
        "b5": jax.random.normal(ks[6], (1, nf), jnp.float32) * 0.1,
        "fcw": jax.random.normal(ks[7], (NUM_BRANCH * nf, 1), jnp.float32) * 0.1,
        "fcb": jax.random.normal(ks[8], (1, 1), jnp.float32) * 0.1,
    }
    return p, ks[9]


def reference_forward(token_ids, params):
    # pure-JAX f32 reference mirroring the PyTorch forward (eval mode)
    emb = params["embedding"][token_ids]          # (B, L, E)
    b, l, e = emb.shape
    pooled = []
    for k in FILTER_SIZES:
        w = params[f"w{k}"]                       # (k, E, F)
        bias = params[f"b{k}"]                    # (1, F)
        t = l - k + 1
        acc = sum(jnp.einsum("ble,ef->blf", emb[:, j:j + t, :], w[j])
                  for j in range(k)) + bias[None, :, :]
        pooled.append(jnp.max(jnp.maximum(acc, 0.0), axis=1))
    feats = jnp.concatenate(pooled, axis=1)
    return jax.nn.sigmoid(feats @ params["fcw"] + params["fcb"])[:, 0]


if __name__ == "__main__":
    params, data_key = init_params(jax.random.PRNGKey(0))
    token_ids = jax.random.randint(data_key, (BATCH, SEQ_LEN), 0, VOCAB,
                                   dtype=jnp.int32)

    out = jax.block_until_ready(textcnn_forward(token_ids, params))
    ref = jax.block_until_ready(reference_forward(token_ids, params))

    assert out.shape == (BATCH,)
    # bf16 MXU inputs for the conv GEMM (f32 accumulation, f32 FC) -> loose tolerance
    assert np.allclose(np.asarray(out), np.asarray(ref), atol=2e-2), (out, ref)

    print("KERNEL_OK")
</pallas_src>

<mosaic_0001>
module attributes {stable_mosaic.version = 11 : i64} {
  func.func @textcnn_kernel(%arg0: i32, %arg1: memref<2x16xi32, #tpu.memory_space<vmem>>, %arg2: memref<128x32xbf16, #tpu.memory_space<vmem>>, %arg3: memref<160x128xbf16, #tpu.memory_space<vmem>>, %arg4: memref<1x128xf32, #tpu.memory_space<vmem>>, %arg5: memref<16x128xf32, #tpu.memory_space<vmem>>, %arg6: memref<1x128xf32, #tpu.memory_space<vmem>>, %arg7: memref<1x1xf32, #tpu.memory_space<vmem>>, %arg8: memref<2x1xf32, #tpu.memory_space<vmem>>) attributes {dimension_semantics = [#tpu.dimension_semantics<parallel>], iteration_bounds = array<i64: 1>, scalar_prefetch = 0 : i64, scratch_operands = 0 : i64, tpu.core_type = #tpu.core_type<tc>, window_params = [{transform_indices = @transform_0, window_bounds = array<i64: 2, 16>}, {pipeline_mode = #tpu.pipeline_mode<synchronous>, transform_indices = @transform_1, window_bounds = array<i64: 128, 32>}, {pipeline_mode = #tpu.pipeline_mode<synchronous>, transform_indices = @transform_2, window_bounds = array<i64: 160, 128>}, {pipeline_mode = #tpu.pipeline_mode<synchronous>, transform_indices = @transform_3, window_bounds = array<i64: 1, 128>}, {pipeline_mode = #tpu.pipeline_mode<synchronous>, transform_indices = @transform_4, window_bounds = array<i64: 16, 128>}, {pipeline_mode = #tpu.pipeline_mode<synchronous>, transform_indices = @transform_5, window_bounds = array<i64: 1, 128>}, {pipeline_mode = #tpu.pipeline_mode<synchronous>, transform_indices = @transform_6, window_bounds = array<i64: 1, 1>}, {transform_indices = @transform_7, window_bounds = array<i64: 2, 1>}]} {
    %0 = tpu.iota {dimensions = array<i32: 2>} : vector<2x16x128xi32>
    %c0 = arith.constant 0 : index
    %c0_0 = arith.constant 0 : index
    %1 = vector.load %arg1[%c0, %c0_0] : memref<2x16xi32, #tpu.memory_space<vmem>>, vector<2x16xi32>
    %2 = vector.shape_cast %1 : vector<2x16xi32> to vector<2x16x1xi32>
    %3 = vector.broadcast %2 : vector<2x16x1xi32> to vector<2x16x128xi32>
    %4 = arith.cmpi eq, %0, %3 : vector<2x16x128xi32>
    %5 = arith.extui %4 : vector<2x16x128xi1> to vector<2x16x128xi32>
    %6 = arith.sitofp %5 : vector<2x16x128xi32> to vector<2x16x128xf32>
    %7 = arith.truncf %6 : vector<2x16x128xf32> to vector<2x16x128xbf16>
    %8 = vector.shape_cast %7 : vector<2x16x128xbf16> to vector<32x128xbf16>
    %c0_1 = arith.constant 0 : index
    %c0_2 = arith.constant 0 : index
    %9 = vector.load %arg2[%c0_1, %c0_2] : memref<128x32xbf16, #tpu.memory_space<vmem>>, vector<128x32xbf16>
    %cst = arith.constant dense<0.000000e+00> : vector<32x32xf32>
    %10 = tpu.matmul %8, %9, %cst {dimension_numbers = #tpu.dot_dimension_numbers<[1], [0], [0], [1], [0, 0, 1, 1], [], []>} : vector<32x128xbf16>, vector<128x32xbf16>, vector<32x32xf32> -> vector<32x32xf32>
    %c31_i32 = arith.constant 31 : i32
    %11 = tpu.dynamic_rotate %10 by %c31_i32 dim 0 : vector<32x32xf32>, i32 -> vector<32x32xf32>
    %c30_i32 = arith.constant 30 : i32
    %12 = tpu.dynamic_rotate %10 by %c30_i32 dim 0 : vector<32x32xf32>, i32 -> vector<32x32xf32>
    %c29_i32 = arith.constant 29 : i32
    %13 = tpu.dynamic_rotate %10 by %c29_i32 dim 0 : vector<32x32xf32>, i32 -> vector<32x32xf32>
    %c28_i32 = arith.constant 28 : i32
    %14 = tpu.dynamic_rotate %10 by %c28_i32 dim 0 : vector<32x32xf32>, i32 -> vector<32x32xf32>
    %15 = tpu.concatenate %10, %11, %12, %13, %14 in 1 : vector<32x32xf32>, vector<32x32xf32>, vector<32x32xf32>, vector<32x32xf32>, vector<32x32xf32> -> vector<32x160xf32>
    %16 = arith.truncf %15 : vector<32x160xf32> to vector<32x160xbf16>
    %c0_3 = arith.constant 0 : index
    %c0_4 = arith.constant 0 : index
    %17 = vector.load %arg3[%c0_3, %c0_4] : memref<160x128xbf16, #tpu.memory_space<vmem>>, vector<160x128xbf16>
    %cst_5 = arith.constant dense<0.000000e+00> : vector<32x128xf32>
    %18 = tpu.matmul %16, %17, %cst_5 {dimension_numbers = #tpu.dot_dimension_numbers<[1], [0], [0], [1], [0, 0, 1, 1], [], []>} : vector<32x160xbf16>, vector<160x128xbf16>, vector<32x128xf32> -> vector<32x128xf32>
    %c0_6 = arith.constant 0 : index
    %c0_7 = arith.constant 0 : index
    %19 = vector.load %arg4[%c0_6, %c0_7] : memref<1x128xf32, #tpu.memory_space<vmem>>, vector<1x128xf32>
    %20 = vector.broadcast %19 : vector<1x128xf32> to vector<32x128xf32>
    %21 = arith.addf %18, %20 : vector<32x128xf32>
    %cst_8 = arith.constant 0.000000e+00 : f32
    %22 = vector.broadcast %cst_8 : f32 to vector<32x128xf32>
    %23 = arith.maximumf %21, %22 : vector<32x128xf32>
    %24 = vector.shape_cast %23 : vector<32x128xf32> to vector<2x16x128xf32>
    %c0_9 = arith.constant 0 : index
    %c0_10 = arith.constant 0 : index
    %25 = vector.load %arg5[%c0_9, %c0_10] : memref<16x128xf32, #tpu.memory_space<vmem>>, vector<16x128xf32>
    %26 = vector.shape_cast %25 : vector<16x128xf32> to vector<1x16x128xf32>
    %27 = vector.broadcast %26 : vector<1x16x128xf32> to vector<2x16x128xf32>
    %28 = arith.mulf %24, %27 : vector<2x16x128xf32>
    %cst_11 = arith.constant dense<0xFF800000> : vector<2x128xf32>
    %29 = vector.multi_reduction <maximumf>, %28, %cst_11 [1] : vector<2x16x128xf32> to vector<2x128xf32>
    %c0_12 = arith.constant 0 : index
    %c0_13 = arith.constant 0 : index
    %30 = vector.load %arg6[%c0_12, %c0_13] : memref<1x128xf32, #tpu.memory_space<vmem>>, vector<1x128xf32>
    %31 = vector.broadcast %30 : vector<1x128xf32> to vector<2x128xf32>
    %32 = arith.mulf %29, %31 : vector<2x128xf32>
    %cst_14 = arith.constant dense<0.000000e+00> : vector<2xf32>
    %33 = vector.multi_reduction <add>, %32, %cst_14 [1] : vector<2x128xf32> to vector<2xf32>
    %34 = vector.shape_cast %33 : vector<2xf32> to vector<2x1xf32>
    %c0_15 = arith.constant 0 : index
    %c0_16 = arith.constant 0 : index
    %35 = vector.load %arg7[%c0_15, %c0_16] : memref<1x1xf32, #tpu.memory_space<vmem>>, vector<1x1xf32>
    %36 = vector.broadcast %35 : vector<1x1xf32> to vector<2x1xf32>
    %37 = arith.addf %34, %36 : vector<2x1xf32>
    %38 = arith.negf %37 : vector<2x1xf32>
    %39 = math.exp %38 : vector<2x1xf32>
    %cst_17 = arith.constant 1.000000e+00 : f32
    %40 = vector.broadcast %cst_17 : f32 to vector<2x1xf32>
    %41 = arith.addf %40, %39 : vector<2x1xf32>
    %42 = arith.divf %40, %41 : vector<2x1xf32>
    %c0_18 = arith.constant 0 : index
    %c0_19 = arith.constant 0 : index
    %43 = vector.load %arg8[%c0_18, %c0_19] : memref<2x1xf32, #tpu.memory_space<vmem>>, vector<2x1xf32>
    tpu.vector_store %arg8[%c0_18, %c0_19], %42 {strides = array<i32>} : memref<2x1xf32, #tpu.memory_space<vmem>>, vector<2x1xf32>,
    return
  }
  func.func @transform_0(%arg0: i32) -> (i32, i32) {
    %c0_i32 = arith.constant 0 : i32
    %c0_i32_0 = arith.constant 0 : i32
    return %arg0, %c0_i32 : i32, i32
  }
  func.func @transform_1(%arg0: i32) -> (i32, i32) {
    %c0_i32 = arith.constant 0 : i32
    %c0_i32_0 = arith.constant 0 : i32
    %c0_i32_1 = arith.constant 0 : i32
    return %c0_i32, %c0_i32_0 : i32, i32
  }
  func.func @transform_2(%arg0: i32) -> (i32, i32) {
    %c0_i32 = arith.constant 0 : i32
    %c0_i32_0 = arith.constant 0 : i32
    %c0_i32_1 = arith.constant 0 : i32
    return %c0_i32, %c0_i32_0 : i32, i32
  }
  func.func @transform_3(%arg0: i32) -> (i32, i32) {
    %c0_i32 = arith.constant 0 : i32
    %c0_i32_0 = arith.constant 0 : i32
    %c0_i32_1 = arith.constant 0 : i32
    return %c0_i32, %c0_i32_0 : i32, i32
  }
  func.func @transform_4(%arg0: i32) -> (i32, i32) {
    %c0_i32 = arith.constant 0 : i32
    %c0_i32_0 = arith.constant 0 : i32
    %c0_i32_1 = arith.constant 0 : i32
    return %c0_i32, %c0_i32_0 : i32, i32
  }
  func.func @transform_5(%arg0: i32) -> (i32, i32) {
    %c0_i32 = arith.constant 0 : i32
    %c0_i32_0 = arith.constant 0 : i32
    %c0_i32_1 = arith.constant 0 : i32
    return %c0_i32, %c0_i32_0 : i32, i32
  }
  func.func @transform_6(%arg0: i32) -> (i32, i32) {
    %c0_i32 = arith.constant 0 : i32
    %c0_i32_0 = arith.constant 0 : i32
    %c0_i32_1 = arith.constant 0 : i32
    return %c0_i32, %c0_i32_0 : i32, i32
  }
  func.func @transform_7(%arg0: i32) -> (i32, i32) {
    %c0_i32 = arith.constant 0 : i32
    %c0_i32_0 = arith.constant 0 : i32
    return %arg0, %c0_i32 : i32, i32
  }
}

</mosaic_0001>

<llo_original>
// kernel: tpu_custom_call.1
$region0: #{tpu_custom_call.1}
  #allocation0 [shape = 'u32[]', space=smem, size = 0x4, offset = 0x4, fixed_abs, tag = 'smem constant byte address 0x4 - core index']
  #allocation1 [shape = 'u32[72,128]{1,0:T(1,128)}', space=vmem, size = 0x9000, scoped, tag = 'internal scratch']
  #allocation2 [shape = 'f32[1,1]{1,0:T(1,128)S(1)}', space=vmem, size = 0x200, scoped, tag = 'scoped memory for tpu_custom_call.1']
  %s0 = inlined_call_operand.vmem [shape: s32[2,16], index: 0, kind: input, shape index: {}]
  %s1 = inlined_call_operand.vmem [shape: bf16[128,32], index: 1, kind: input, shape index: {}]
  %s2 = inlined_call_operand.vmem [shape: bf16[160,128], index: 2, kind: input, shape index: {}]
  %s3 = inlined_call_operand.vmem [shape: f32[1,128], index: 3, kind: input, shape index: {}]
  %s4 = inlined_call_operand.hbm [shape: f32[16,128], index: 4, kind: input, shape index: {}]
  %s5 = inlined_call_operand.vmem [shape: f32[1,128], index: 5, kind: input, shape index: {}]
  %s6 = inlined_call_operand.<no memory space> [shape: f32[1,1], index: 6, kind: input, shape index: {}]
  %s7 = inlined_call_operand.vmem [shape: f32[2,1], index: 7, kind: output, shape index: {}]
  %s8 = sld [smem:[#allocation0]]
  $region42: #{tpu_custom_call.1} parent=0
    _
  %s10 = ssub.s32 1, %s8
  %s11 = scalar_select 0, %s10, %s8
  %v12 = vstv %s6
  %13 = vst [vmem:[#allocation2] sm:$0x1] %v12
  $region1: #{tpu_custom_call.1} parent=0
    #allocation3 [shape = 'u8[8192]{0}', space=vmem, size = 0x2000, scoped, tag = 'input window, operand 4, single buffered']
    #allocation4 [shape = 's32[1]{0}', space=sflag, size = 0x4, scoped, tag = 'scoped memory for tpu_custom_call.1']
    %14 = vsyncpa [#allocation4], 0
    // Predicated region
    $region2: #{tpu_custom_call.1} parent=1 // pred_check
      _
    $region3: #{tpu_custom_call.1} parent=1 // pred_check_branch
      %16 = sbr.rel (0) target = $region5
    $region4: #{tpu_custom_call.1} parent=1 // pred_region
      _
    $region5: #{tpu_custom_call.1} parent=1 // pred_fallthru
      _
    // Predicated region
    $region6: #{tpu_custom_call.1} parent=1 // pred_check
      _
    $region7: #{tpu_custom_call.1} parent=1 // pred_check_branch
      %18 = sbr.rel (0) target = $region9
    $region8: #{tpu_custom_call.1} parent=1 // pred_region
      _
    $region9: #{tpu_custom_call.1} parent=1 // pred_fallthru
      _
    // Predicated region
    $region10: #{tpu_custom_call.1} parent=1 // pred_check
      _
    $region11: #{tpu_custom_call.1} parent=1 // pred_check_branch
      %20 = sbr.rel (0) target = $region13
    $region12: #{tpu_custom_call.1} parent=1 // pred_region
      _
    $region13: #{tpu_custom_call.1} parent=1 // pred_fallthru
      _
    // Predicated region
    $region14: #{tpu_custom_call.1} parent=1 // pred_check
      _
    $region15: #{tpu_custom_call.1} parent=1 // pred_check_branch
      %22 = sbr.rel (0) target = $region17
    $region16: #{tpu_custom_call.1} parent=1 // pred_region
      _
    $region17: #{tpu_custom_call.1} parent=1 // pred_fallthru
      _
    // Predicated region
    $region18: #{tpu_custom_call.1} parent=1 // pred_check
      _
    $region19: #{tpu_custom_call.1} parent=1 // pred_check_branch
      %24 = sbr.rel (0) target = $region21
    $region20: #{tpu_custom_call.1} parent=1 // pred_region
      %26 = vsyncadd [#allocation4], 0
      %s27 = sshll.u32 %s4, 4
      %s28 = int_to_ptr.hbm [resolvable:$true] %s27
      %s29 = sshll.u32 [#allocation3], 4
      %s30 = int_to_ptr.vmem [resolvable:$true] %s29
      %35 = dma.hbm_to_vmem [thread:$0]  %s28, 256, %s30, [#allocation4], 128, 128, 8
    $region21: #{tpu_custom_call.1} parent=1 // pred_fallthru
      _
    // Predicated region
    $region22: #{tpu_custom_call.1} parent=1 // pred_check
      _
    $region23: #{tpu_custom_call.1} parent=1 // pred_check_branch
      %37 = sbr.rel (0) target = $region25
    $region24: #{tpu_custom_call.1} parent=1 // pred_region
      _
    $region25: #{tpu_custom_call.1} parent=1 // pred_fallthru
      _
    // Predicated region
    $region26: #{tpu_custom_call.1} parent=1 // pred_check
      _
    $region27: #{tpu_custom_call.1} parent=1 // pred_check_branch
      %39 = sbr.rel (0) target = $region29
    $region28: #{tpu_custom_call.1} parent=1 // pred_region
      _
    $region29: #{tpu_custom_call.1} parent=1 // pred_fallthru
      _
    // Predicated region
    $region30: #{tpu_custom_call.1} parent=1 // pred_check
      _
    $region31: #{tpu_custom_call.1} parent=1 // pred_check_branch
      %41 = sbr.rel (0) target = $region33
    $region32: #{tpu_custom_call.1} parent=1 // pred_region
      %43 = dma.done [#allocation4], 256
    $region33: #{tpu_custom_call.1} parent=1 // pred_fallthru
      _
    %v45 = vlaneseq
    %v46 = vand.u32 %v45, 127
    %v47 = vld [vmem:[%s0] sm:$0x3]
    %v48 = vperm.slane %v47, 0
    %v49 = vlaneseq
    %v50 = vshrl.u32 %v49, 7
    %52 = vset.pattern.permute.xlu0 %v50
    %53 = vperm.xlu0 %52, %v48
    %v54 = vpop.permute.xlu0 %53
    %v55 = vlaneseq
    %v56 = vshrl.u32 %v55, 7
    %v57 = vadd.s32 %v56, 8
    %58 = vset.pattern.permute.xlu0 %v57
    %59 = vperm.xlu0 %58, %v48
    %v60 = vpop.permute.xlu0 %59
    %v61 = vperm.slane %v47, 1
    %v62 = vlaneseq
    %v63 = vshrl.u32 %v62, 7
    %65 = vset.pattern.permute.xlu0 %v63
    %66 = vperm.xlu0 %65, %v61
    %v67 = vpop.permute.xlu0 %66
    %v68 = vlaneseq
    %v69 = vshrl.u32 %v68, 7
    %v70 = vadd.s32 %v69, 8
    %71 = vset.pattern.permute.xlu0 %v70
    %72 = vperm.xlu0 %71, %v61
    %v73 = vpop.permute.xlu0 %72
    %vm74 = vcmp.eq.s32.totalorder %v46, %v54
    %vm75 = vcmp.eq.s32.totalorder %v46, %v60
    %vm76 = vcmp.eq.s32.totalorder %v46, %v67
    %vm77 = vcmp.eq.s32.totalorder %v46, %v73
    %v78 = vsel %vm74, 1, 0
    %v79 = vsel %vm75, 1, 0
    %v80 = vsel %vm76, 1, 0
    %v81 = vsel %vm77, 1, 0
    %v82 = vcvt.s32.f32 %v78
    %v83 = vcvt.s32.f32 %v79
    %v84 = vcvt.s32.f32 %v80
    %v85 = vcvt.s32.f32 %v81
    %v86 = vpack.c.bf16 %v82, %v82
    %v87 = vpack.c.bf16 %v83, %v83
    %v88 = vpack.c.bf16 %v84, %v84
    %v89 = vpack.c.bf16 %v85, %v85
    %v90 = vld [vmem:[%s1] sm:$0xf]
    %v91 = vld [vmem:[%s1 + $0x4] sm:$0xf]
    %v92 = vld [vmem:[%s1 + $0x8] sm:$0xf]
    %v93 = vld [vmem:[%s1 + $0xc] sm:$0xf]
    %v94 = vld [vmem:[%s1 + $0x10] sm:$0xf]
    %v95 = vld [vmem:[%s1 + $0x14] sm:$0xf]
    %v96 = vld [vmem:[%s1 + $0x18] sm:$0xf]
    %v97 = vld [vmem:[%s1 + $0x1c] sm:$0xf]
    %v98 = vld [vmem:[%s1 + $0x20] sm:$0xf]
    %v99 = vld [vmem:[%s1 + $0x24] sm:$0xf]
    %v100 = vld [vmem:[%s1 + $0x28] sm:$0xf]
    %v101 = vld [vmem:[%s1 + $0x2c] sm:$0xf]
    %v102 = vld [vmem:[%s1 + $0x30] sm:$0xf]
    %v103 = vld [vmem:[%s1 + $0x34] sm:$0xf]
    %v104 = vld [vmem:[%s1 + $0x38] sm:$0xf]
    %v105 = vld [vmem:[%s1 + $0x3c] sm:$0xf]
    %v110 = vunpack.c.l.b16 %v86
    %v111 = vunpack.c.l.b16 %v87
    %v112 = vunpack.c.l.b16 %v88
    %v113 = vunpack.c.l.b16 %v89
    %v114 = vpack.c.b16 %v111, %v110
    %v115 = vpack.c.b16 %v113, %v112
    %v134 = vunpack.c.l.b16 %v90
    %v135 = vunpack.c.l.b16 %v91
    %v136 = vunpack.c.l.b16 %v92
    %v137 = vunpack.c.l.b16 %v93
    %v138 = vunpack.c.l.b16 %v94
    %v139 = vunpack.c.l.b16 %v95
    %v140 = vunpack.c.l.b16 %v96
    %v141 = vunpack.c.l.b16 %v97
    %v142 = vunpack.c.l.b16 %v98
    %v143 = vunpack.c.l.b16 %v99
    %v144 = vunpack.c.l.b16 %v100
    %v145 = vunpack.c.l.b16 %v101
    %v146 = vunpack.c.l.b16 %v102
    %v147 = vunpack.c.l.b16 %v103
    %v148 = vunpack.c.l.b16 %v104
    %v149 = vunpack.c.l.b16 %v105
    %v150 = vpack.c.b16 %v135, %v134
    %v151 = vpack.c.b16 %v137, %v136
    %v152 = vpack.c.b16 %v139, %v138
    %v153 = vpack.c.b16 %v141, %v140
    %v154 = vpack.c.b16 %v143, %v142
    %v155 = vpack.c.b16 %v145, %v144
    %v156 = vpack.c.b16 %v147, %v146
    %v157 = vpack.c.b16 %v149, %v148
    %166 = vmatpush.bf16.msra.mxu0 %v157
    %167 = vmatpush.bf16.msra.mxu0 %v156
    %168 = vmatpush.bf16.msra.mxu0 %v155
    %169 = vmatpush.bf16.msra.mxu0 %v154
    %170 = vmatpush.bf16.msra.mxu0 %v153
    %171 = vmatpush.bf16.msra.mxu0 %v152
    %172 = vmatpush.bf16.msra.mxu0 %v151
    %173 = vmatpush.bf16.msra.mxu0 %v150
    %174 = vmatmul.bf16.gmra.mxu0 %v114
    %v175 = vpop.f32.mrf.mxu0
    %v176 = vadd.f32 0.0, %v175
    %v177 = vpop.f32.mrf.mxu0
    %v178 = vadd.f32 0.0, %v177
    %179 = vmatmul.bf16.gmra.mxu0 %v115
    %v180 = vpop.f32.mrf.mxu0
    %v181 = vadd.f32 0.0, %v180
    %v182 = vpop.f32.mrf.mxu0
    %v183 = vadd.f32 0.0, %v182
    %184 = vdwg.mxu0
    %v185 = vrot.slane %v176, 1
    %v186 = vrot.slane %v178, 1
    %v187 = vrot.slane %v181, 1
    %v188 = vrot.slane %v183, 1
    %v189 = vlaneseq
    %v190 = vshrl.u32 %v189, 7
    %vm191 = vcmp.lt.s32.totalorder %v190, 7
    %v192 = vsel %vm191, %v187, %v188
    %v193 = vsel %vm191, %v186, %v187
    %v194 = vsel %vm191, %v185, %v186
    %v195 = vsel %vm191, %v188, %v185
    %v196 = vrot.slane %v176, 2
    %v197 = vrot.slane %v178, 2
    %v198 = vrot.slane %v181, 2
    %v199 = vrot.slane %v183, 2
    %vm200 = vcmp.lt.s32.totalorder %v190, 6
    %v201 = vsel %vm200, %v198, %v199
    %v202 = vsel %vm200, %v197, %v198
    %v203 = vsel %vm200, %v196, %v197
    %v204 = vsel %vm200, %v199, %v196
    %v205 = vrot.slane %v176, 3
    %v206 = vrot.slane %v178, 3
    %v207 = vrot.slane %v181, 3
    %v208 = vrot.slane %v183, 3
    %vm209 = vcmp.lt.s32.totalorder %v190, 5
    %v210 = vsel %vm209, %v207, %v208
    %v211 = vsel %vm209, %v206, %v207
    %v212 = vsel %vm209, %v205, %v206
    %v213 = vsel %vm209, %v208, %v205
    %v214 = vrot.slane %v176, 4
    %v215 = vrot.slane %v178, 4
    %v216 = vrot.slane %v181, 4
    %v217 = vrot.slane %v183, 4
    %vm218 = vcmp.lt.s32.totalorder %v190, 4
    %v219 = vsel %vm218, %v216, %v217
    %v220 = vsel %vm218, %v215, %v216
    %v221 = vsel %vm218, %v214, %v215
    %v222 = vsel %vm218, %v217, %v214
    %227 = vrot.lane.b32.xlu0 %v194, 32
    %v228 = vpop.permute.xlu0 %227
    %229 = vrot.lane.b32.xlu0 %v193, 32
    %v230 = vpop.permute.xlu0 %229
    %231 = vrot.lane.b32.xlu0 %v192, 32
    %v232 = vpop.permute.xlu0 %231
    %233 = vrot.lane.b32.xlu0 %v195, 32
    %v234 = vpop.permute.xlu0 %233
    %243 = vrot.lane.b32.xlu0 %v203, 64
    %v244 = vpop.permute.xlu0 %243
    %245 = vrot.lane.b32.xlu0 %v202, 64
    %v246 = vpop.permute.xlu0 %245
    %247 = vrot.lane.b32.xlu0 %v201, 64
    %v248 = vpop.permute.xlu0 %247
    %249 = vrot.lane.b32.xlu0 %v204, 64
    %v250 = vpop.permute.xlu0 %249
    %259 = vrot.lane.b32.xlu0 %v212, 96
    %v260 = vpop.permute.xlu0 %259
    %261 = vrot.lane.b32.xlu0 %v211, 96
    %v262 = vpop.permute.xlu0 %261
    %263 = vrot.lane.b32.xlu0 %v210, 96
    %v264 = vpop.permute.xlu0 %263
    %265 = vrot.lane.b32.xlu0 %v213, 96
    %v266 = vpop.permute.xlu0 %265
    %vm271 = vcmask 261120
    %v272 = vsel %vm271, %v176, %v228
    %v273 = vsel %vm271, %v178, %v230
    %v274 = vsel %vm271, %v181, %v232
    %v275 = vsel %vm271, %v183, %v234
    %vm276 = vcmask 523264
    %v277 = vsel %vm276, %v272, %v244
    %v278 = vsel %vm276, %v273, %v246
    %v279 = vsel %vm276, %v274, %v248
    %v280 = vsel %vm276, %v275, %v250
    %vm281 = vcmask 785408
    %v282 = vsel %vm281, %v277, %v260
    %v283 = vsel %vm281, %v278, %v262
    %v284 = vsel %vm281, %v279, %v264
    %v285 = vsel %vm281, %v280, %v266
    %v286 = vpack.c.bf16 %v283, %v282
    %v287 = vpack.c.bf16 %v220, %v221
    %v288 = vpack.c.bf16 %v285, %v284
    %v289 = vpack.c.bf16 %v222, %v219
    %v290 = vld [vmem:[%s2] sm:$0xf]
    %v291 = vld [vmem:[%s2 + $0x4] sm:$0xf]
    %v292 = vld [vmem:[%s2 + $0x8] sm:$0xf]
    %v293 = vld [vmem:[%s2 + $0xc] sm:$0xf]
    %v294 = vld [vmem:[%s2 + $0x10] sm:$0xf]
    %v295 = vld [vmem:[%s2 + $0x14] sm:$0xf]
    %v296 = vld [vmem:[%s2 + $0x18] sm:$0xf]
    %v297 = vld [vmem:[%s2 + $0x1c] sm:$0xf]
    %v298 = vld [vmem:[%s2 + $0x20] sm:$0xf]
    %v299 = vld [vmem:[%s2 + $0x24] sm:$0xf]
    %v300 = vld [vmem:[%s2 + $0x28] sm:$0xf]
    %v301 = vld [vmem:[%s2 + $0x2c] sm:$0xf]
    %v302 = vld [vmem:[%s2 + $0x30] sm:$0xf]
    %v303 = vld [vmem:[%s2 + $0x34] sm:$0xf]
    %v304 = vld [vmem:[%s2 + $0x38] sm:$0xf]
    %v305 = vld [vmem:[%s2 + $0x3c] sm:$0xf]
    %v306 = vld [vmem:[%s2 + $0x40] sm:$0xf]
    %v307 = vld [vmem:[%s2 + $0x44] sm:$0xf]
    %v308 = vld [vmem:[%s2 + $0x48] sm:$0xf]
    %v309 = vld [vmem:[%s2 + $0x4c] sm:$0xf]
    %v310 = vld [vmem:[%s3] sm:$0x1]
    %v312 = vperm.slane %v310, 0
    %v334 = vunpack.c.l.b16 %v290
    %v335 = vunpack.c.l.b16 %v291
    %v336 = vunpack.c.l.b16 %v292
    %v337 = vunpack.c.l.b16 %v293
    %v338 = vunpack.c.l.b16 %v294
    %v339 = vunpack.c.l.b16 %v295
    %v340 = vunpack.c.l.b16 %v296
    %v341 = vunpack.c.l.b16 %v297
    %v342 = vunpack.c.l.b16 %v298
    %v343 = vunpack.c.l.b16 %v299
    %v344 = vunpack.c.l.b16 %v300
    %v345 = vunpack.c.l.b16 %v301
    %v346 = vunpack.c.l.b16 %v302
    %v347 = vunpack.c.l.b16 %v303
    %v348 = vunpack.c.l.b16 %v304
    %v349 = vunpack.c.l.b16 %v305
    %v350 = vunpack.c.l.b16 %v306
    %v351 = vunpack.c.l.b16 %v307
    %v352 = vunpack.c.l.b16 %v308
    %v353 = vunpack.c.l.b16 %v309
    %v354 = vpack.c.b16 %v335, %v334
    %v355 = vpack.c.b16 %v337, %v336
    %v356 = vpack.c.b16 %v339, %v338
    %v357 = vpack.c.b16 %v341, %v340
    %v358 = vpack.c.b16 %v343, %v342
    %v359 = vpack.c.b16 %v345, %v344
    %v360 = vpack.c.b16 %v347, %v346
    %v361 = vpack.c.b16 %v349, %v348
    %v362 = vpack.c.b16 %v351, %v350
    %v363 = vpack.c.b16 %v353, %v352
    %v375 = vsel %vm271, %v287, 0
    %v378 = vsel %vm271, %v289, 0
    %380 = vmatpush.bf16.msra.mxu0 %v361
    %381 = vmatpush.bf16.msra.mxu0 %v360
    %382 = vmatpush.bf16.msra.mxu0 %v359
    %383 = vmatpush.bf16.msra.mxu0 %v358
    %384 = vmatpush.bf16.msra.mxu0 %v357
    %385 = vmatpush.bf16.msra.mxu0 %v356
    %386 = vmatpush.bf16.msra.mxu0 %v355
    %387 = vmatpush.bf16.msra.mxu0 %v354
    %388 = vmatmul.bf16.gmra.mxu0 %v286
    %v389 = vpop.f32.mrf.mxu0
    %v390 = vadd.f32 %v312, %v389
    %v391 = vpop.f32.mrf.mxu0
    %v392 = vadd.f32 %v312, %v391
    %393 = vmatmul.bf16.gmra.mxu0 %v288
    %v394 = vpop.f32.mrf.mxu0
    %v395 = vadd.f32 %v312, %v394
    %v396 = vpop.f32.mrf.mxu0
    %v397 = vadd.f32 %v312, %v396
    %398 = vdwg.mxu0
    %399 = vmatpush.bf16.msra.mxu0 0
    %400 = vmatpush.bf16.msra.mxu0 0
    %401 = vmatpush.bf16.msra.mxu0 0
    %402 = vmatpush.bf16.msra.mxu0 0
    %403 = vmatpush.bf16.msra.mxu0 0
    %404 = vmatpush.bf16.msra.mxu0 0
    %405 = vmatpush.bf16.msra.mxu0 %v363
    %406 = vmatpush.bf16.msra.mxu0 %v362
    %407 = vmatmul.bf16.gmra.mxu0 %v375
    %v408 = vpop.f32.mrf.mxu0
    %v409 = vadd.f32 %v390, %v408
    %v410 = vpop.f32.mrf.mxu0
    %v411 = vadd.f32 %v392, %v410
    %412 = vmatmul.bf16.gmra.mxu0 %v378
    %v413 = vpop.f32.mrf.mxu0
    %v414 = vadd.f32 %v395, %v413
    %v415 = vpop.f32.mrf.mxu0
    %v416 = vadd.f32 %v397, %v415
    %417 = vdwg.mxu0
    %v418 = vmax.f32 %v409, 0.0
    %v419 = vmax.f32 %v411, 0.0
    %v420 = vmax.f32 %v414, 0.0
    %v421 = vmax.f32 %v416, 0.0
    %v422 = vld [vmem:[#allocation3] sm:$0xff]
    %v423 = vld [vmem:[#allocation3 + $0x8] sm:$0xff]
    %v424 = vmul.f32 %v418, %v422
    %v425 = vmul.f32 %v419, %v423
    %v426 = vmul.f32 %v420, %v422
    %v427 = vmul.f32 %v421, %v423
    %v428 = vmax.f32 %v424, %v425
    %v429 = vrot.slane %v428, 4
    %v430 = vmax.f32 %v428, %v429
    %v431 = vrot.slane %v430, 2
    %v432 = vmax.f32 %v430, %v431
    %v433 = vrot.slane %v432, 1
    %v434 = vmax.f32 %v432, %v433
    %v435 = vmax.f32 %v426, %v427
    %v436 = vrot.slane %v435, 4
    %v437 = vmax.f32 %v435, %v436
    %v438 = vrot.slane %v437, 2
    %v439 = vmax.f32 %v437, %v438
    %v440 = vrot.slane %v439, 1
    %v441 = vmax.f32 %v439, %v440
    %v442 = vld [vmem:[%s5] sm:$0x1]
    %v444 = vperm.slane %v442, 0
    %v446 = vmul.f32 %v434, %v444
    %v447 = vmul.f32 %v441, %v444
    %v450 = vrot.slane %v447, 7
    %vm451 = vcmask 1041409
    %v452 = vsel %vm451, %v450, %v446
    %vm454 = vcmask 1041408
    %v455 = vsel %vm454, %v452, 0.0
    %456 = vadd.xlane.f32.xlu0 %v455
    %v457 = vpop.xlane.xlu0 %456
    %v458 = vld [vmem:[#allocation2] sm:$0x1]
    %v460 = vperm.slane %v458, 0
    %v462 = vadd.f32 %v457, %v460
    %v463 = vxor.u32 %v462, 2147483648
    %v464 = vmul.f32 %v463, 1.442695
    %v465 = vpow.pop %v464
    %v466 = vadd.f32 %v465, 1.0
    %v467 = vrcp.pop %v466
    %v468 = vmul.f32 %v466, %v467
    %v469 = vsub.f32 1.0, %v468
    %v470 = vmul.f32 %v467, %v469
    %v471 = vadd.f32 %v467, %v470
    %vm472 = vweird.f32 %v466
    %vm473 = vweird.f32 %v467
    %vm474 = vmor %vm472, %vm473
    %v475 = vsel %vm474, %v467, %v471
    %v476 = vand.u32 2147483647, %v466
    %vm477 = vcmp.eq.f32.partialorder %v476, 8.507059e+37
    %v478 = vand.u32 %v466, 2147483648
    %v479 = vor.u32 1.1754944e-38, %v478
    %v480 = vsel %vm477, %v479, %v475
    %v481 = vmul.f32 1.0, %v480
    %vm482 = vcmask 1024
    %483 = vst.msk [vmem:[%s7] sm:$0x3] %vm482, %v481
    // Predicated region
    $region34: #{tpu_custom_call.1} parent=1 // pred_check
      _
    $region35: #{tpu_custom_call.1} parent=1 // pred_check_branch
      %485 = sbr.rel (0) target = $region37
    $region36: #{tpu_custom_call.1} parent=1 // pred_region
      _
    $region37: #{tpu_custom_call.1} parent=1 // pred_fallthru
      _
    // Predicated region
    $region38: #{tpu_custom_call.1} parent=1 // pred_check
      _
    $region39: #{tpu_custom_call.1} parent=1 // pred_check_branch
      %487 = sbr.rel (0) target = $region41
    $region40: #{tpu_custom_call.1} parent=1 // pred_region
      _
    $region41: #{tpu_custom_call.1} parent=1 // pred_fallthru
      _
    %488 = vsyncpa [#allocation4], 1

</llo_original>
